<compile_context>
chip_gen: v7x
topology: tpu7x:2x2x1
jax: 0.10.0
libtpu: 0.0.40
codegen_flags: <defaults>
</compile_context>

<pallas_src>
import math

import jax
import jax.numpy as jnp
from jax.experimental import pallas as pl
from jax.experimental.pallas import tpu as pltpu


# ----------------------------------------------------------------------------
# Kernel (transposed / lane-dense layout)
# ----------------------------------------------------------------------------
def _learned_sinusoidal_kernel(x_ref, w_ref, o_ref):
    # x_ref: (1, tb)  -- batch on the 128-lane axis (dense loads)
    # w_ref: (half, 1)
    # o_ref: (1 + 2*half, tb) -- row 0 = x, rows 1..half = sin, rest = cos
    half = w_ref.shape[0]
    x = x_ref[...].astype(jnp.float32)                          # (1, tb)
    # Fold 2*pi into the weight column once per tile (half muls, not tm*half).
    w = w_ref[...].astype(jnp.float32) * (2.0 * math.pi)        # (half, 1)
    # Size-1 contraction == outer product: broadcast multiply on the VPU.
    freq = w * x                                                # (half, tb)
    # Three dense (full-lane) sub-stores; no in-kernel concatenate.
    o_ref[pl.ds(0, 1), :] = x.astype(o_ref.dtype)
    o_ref[pl.ds(1, half), :] = jnp.sin(freq).astype(o_ref.dtype)
    o_ref[pl.ds(1 + half, half), :] = jnp.cos(freq).astype(o_ref.dtype)


# ----------------------------------------------------------------------------
# Tile selection
# ----------------------------------------------------------------------------
def _choose_lane_tile(B, out_dim, dtype_bytes, target_block_bytes):
    # Small inputs: one full-width block (block == full array dim, so the
    # 128-divisibility requirement on the lane axis does not apply).
    if B <= 256:
        return B
    # Aim for ~target_block_bytes of output per grid step; lane tiles must be
    # multiples of 128.
    tb = (target_block_bytes // (out_dim * dtype_bytes)) // 128 * 128
    tb = max(128, tb)
    # Keep at least 2 grid blocks so v7x's two TensorCores both get work
    # (grid axis is marked "parallel").
    half_b = ((B + 1) // 2 + 127) // 128 * 128
    return int(min(tb, half_b))


# ----------------------------------------------------------------------------
# pallas_call wrapper (transposed core)
# ----------------------------------------------------------------------------
def _pos_emb_transposed(x_row, w_col, out_dtype, target_block_bytes):
    """x_row: (1, B), w_col: (half, 1) -> (1 + 2*half, B), lane-dense."""
    B = x_row.shape[1]
    half = w_col.shape[0]
    out_dim = 1 + 2 * half
    dtype_bytes = jnp.dtype(out_dtype).itemsize

    tb = _choose_lane_tile(B, out_dim, dtype_bytes, target_block_bytes)
    grid = (pl.cdiv(B, tb),)

    return pl.pallas_call(
        _learned_sinusoidal_kernel,
        out_shape=jax.ShapeDtypeStruct((out_dim, B), out_dtype),
        grid=grid,
        in_specs=[
            pl.BlockSpec((1, tb), lambda i: (0, i)),        # x, lane-dense
            pl.BlockSpec((half, 1), lambda i: (0, 0)),      # weights, resident
        ],
        out_specs=pl.BlockSpec((out_dim, tb), lambda i: (0, i)),
        compiler_params=pltpu.CompilerParams(
            dimension_semantics=("parallel",)),
    )(x_row, w_col)


# ----------------------------------------------------------------------------
# Public API: matches the PyTorch module's output layout
# ----------------------------------------------------------------------------
def learned_sinusoidal_pos_emb(x, weights, *, out_dtype=jnp.float32,
                               target_block_bytes=2 << 20):
    """x: (..., 1), weights: (half,) -> (..., 1 + 2*half) in `out_dtype`."""
    assert x.shape[-1] == 1, "LearnedSinusoidalPosEmb expects trailing dim of 1"
    half = weights.shape[0]
    out_dim = 1 + 2 * half

    lead = x.shape[:-1]
    B = math.prod(lead) if lead else 1

    out_t = _pos_emb_transposed(
        x.reshape(1, B), weights.reshape(half, 1), out_dtype, target_block_bytes)
    # Restore the module's row-major (..., 1 + 2*half) layout in XLA.
    # Consumers that can take the lane-dense transposed slab should consume
    # out_t directly and skip this transpose.
    return out_t.T.reshape(*lead, out_dim)


def reference(x, weights):
    """Pure-JAX reference matching the PyTorch forward (float32)."""
    freq = (x @ weights[None, :]) * (2.0 * math.pi)
    return jnp.concatenate([x, jnp.sin(freq), jnp.cos(freq)], axis=-1)


if __name__ == "__main__":
    dim = 32
    half_dim = dim // 2

    key = jax.random.PRNGKey(0)
    k_x1, k_x2, k_w = jax.random.split(key, 3)

    # Non-trainable randn(half_dim) weights, as in the module init.
    weights = jax.random.normal(k_w, (half_dim,), jnp.float32)

    # Case 1: small timestep batch (single full-width block path).
    x1 = jax.random.normal(k_x1, (8, 1), jnp.float32)
    out1 = jax.block_until_ready(learned_sinusoidal_pos_emb(x1, weights))
    ref1 = reference(x1, weights)
    assert out1.shape == (8, 1 + dim)
    assert jnp.allclose(out1, ref1, atol=1e-5, rtol=1e-5), "mismatch (small)"

    # Case 2: leading dims + ragged last lane block (tiled, multi-block path).
    x2 = jax.random.normal(k_x2, (2, 150, 1), jnp.float32)
    out2 = jax.block_until_ready(learned_sinusoidal_pos_emb(x2, weights))
    ref2 = reference(x2, weights)
    assert out2.shape == (2, 150, 1 + dim)
    assert jnp.allclose(out2, ref2, atol=1e-5, rtol=1e-5), "mismatch (tiled)"

    print("KERNEL_OK")
</pallas_src>

<mosaic_0001>
module attributes {stable_mosaic.version = 11 : i64} {
  func.func @_learned_sinusoidal_kernel(%arg0: i32, %arg1: memref<1x8xf32, #tpu.memory_space<vmem>>, %arg2: memref<16x1xf32, #tpu.memory_space<vmem>>, %arg3: memref<33x8xf32, #tpu.memory_space<vmem>>) attributes {dimension_semantics = [#tpu.dimension_semantics<parallel>], iteration_bounds = array<i64: 1>, scalar_prefetch = 0 : i64, scratch_operands = 0 : i64, tpu.core_type = #tpu.core_type<tc>, window_params = [{transform_indices = @transform_0, window_bounds = array<i64: 1, 8>}, {pipeline_mode = #tpu.pipeline_mode<synchronous>, transform_indices = @transform_1, window_bounds = array<i64: 16, 1>}, {transform_indices = @transform_2, window_bounds = array<i64: 33, 8>}]} {
    %c0 = arith.constant 0 : index
    %c0_0 = arith.constant 0 : index
    %0 = vector.load %arg1[%c0, %c0_0] : memref<1x8xf32, #tpu.memory_space<vmem>>, vector<1x8xf32>
    %c0_1 = arith.constant 0 : index
    %c0_2 = arith.constant 0 : index
    %1 = vector.load %arg2[%c0_1, %c0_2] : memref<16x1xf32, #tpu.memory_space<vmem>>, vector<16x1xf32>
    %cst = arith.constant 6.28318548 : f32
    %2 = vector.broadcast %cst : f32 to vector<16x1xf32>
    %3 = arith.mulf %1, %2 : vector<16x1xf32>
    %4 = vector.broadcast %3 : vector<16x1xf32> to vector<16x8xf32>
    %5 = vector.broadcast %0 : vector<1x8xf32> to vector<16x8xf32>
    %6 = arith.mulf %4, %5 : vector<16x8xf32>
    %c0_3 = arith.constant 0 : index
    %c0_4 = arith.constant 0 : index
    %7 = vector.load %arg3[%c0_3, %c0_4] : memref<33x8xf32, #tpu.memory_space<vmem>>, vector<1x8xf32>
    tpu.vector_store %arg3[%c0_3, %c0_4], %0 {strides = array<i32>} : memref<33x8xf32, #tpu.memory_space<vmem>>, vector<1x8xf32>,
    %8 = math.sin %6 : vector<16x8xf32>
    %c1 = arith.constant 1 : index
    %c0_5 = arith.constant 0 : index
    %9 = vector.load %arg3[%c1, %c0_5] : memref<33x8xf32, #tpu.memory_space<vmem>>, vector<16x8xf32>
    tpu.vector_store %arg3[%c1, %c0_5], %8 {strides = array<i32>} : memref<33x8xf32, #tpu.memory_space<vmem>>, vector<16x8xf32>,
    %10 = math.cos %6 : vector<16x8xf32>
    %c17 = arith.constant 17 : index
    %c0_6 = arith.constant 0 : index
    %11 = vector.load %arg3[%c17, %c0_6] : memref<33x8xf32, #tpu.memory_space<vmem>>, vector<16x8xf32>
    tpu.vector_store %arg3[%c17, %c0_6], %10 {strides = array<i32>} : memref<33x8xf32, #tpu.memory_space<vmem>>, vector<16x8xf32>,
    return
  }
  func.func @transform_0(%arg0: i32) -> (i32, i32) {
    %c0_i32 = arith.constant 0 : i32
    %c0_i32_0 = arith.constant 0 : i32
    return %c0_i32, %arg0 : i32, i32
  }
  func.func @transform_1(%arg0: i32) -> (i32, i32) {
    %c0_i32 = arith.constant 0 : i32
    %c0_i32_0 = arith.constant 0 : i32
    %c0_i32_1 = arith.constant 0 : i32
    return %c0_i32, %c0_i32_0 : i32, i32
  }
  func.func @transform_2(%arg0: i32) -> (i32, i32) {
    %c0_i32 = arith.constant 0 : i32
    %c0_i32_0 = arith.constant 0 : i32
    return %c0_i32, %arg0 : i32, i32
  }
}

</mosaic_0001>

<llo_original>
// kernel: tpu_custom_call.1
$region0: #{tpu_custom_call.1}
  #allocation0 [shape = 'u32[]', space=smem, size = 0x4, offset = 0x4, fixed_abs, tag = 'smem constant byte address 0x4 - core index']
  #allocation1 [shape = 'u32[144,128]{1,0:T(1,128)}', space=vmem, size = 0x12000, scoped, tag = 'internal scratch']
  %s0 = inlined_call_operand.vmem [shape: f32[1,8], index: 0, kind: input, shape index: {}]
  %s1 = inlined_call_operand.vmem [shape: f32[16,1], index: 1, kind: input, shape index: {}]
  %s2 = inlined_call_operand.vmem [shape: f32[33,8], index: 2, kind: output, shape index: {}]
  %s3 = sld [smem:[#allocation0]]
  $region18: #{tpu_custom_call.1} parent=0
    _
  %s5 = ssub.s32 1, %s3
  %s6 = scalar_select 0, %s5, %s3
  // Predicated region
  $region2: #{tpu_custom_call.1} parent=0 // pred_check
    _
  $region3: #{tpu_custom_call.1} parent=0 // pred_check_branch
    %8 = sbr.rel (0) target = $region5
  $region4: #{tpu_custom_call.1} parent=0 // pred_region
    _
  $region5: #{tpu_custom_call.1} parent=0 // pred_fallthru
    _
  // Predicated region
  $region6: #{tpu_custom_call.1} parent=0 // pred_check
    _
  $region7: #{tpu_custom_call.1} parent=0 // pred_check_branch
    %10 = sbr.rel (0) target = $region9
  $region8: #{tpu_custom_call.1} parent=0 // pred_region
    _
  $region9: #{tpu_custom_call.1} parent=0 // pred_fallthru
    _
  %v11 = vld [vmem:[%s0] sm:$0x1]
  %v12 = vld [vmem:[%s1] sm:$0xff]
  %v13 = vld [vmem:[%s1 + $0x8] sm:$0xff]
  %v14 = vmul.f32 %v12, 6.2831855
  %v15 = vmul.f32 %v13, 6.2831855
  %17 = vset.pattern.permute.xlu0 0
  %18 = vperm.xlu0 %17, %v14
  %v19 = vpop.permute.xlu0 %18
  %22 = vset.pattern.permute.xlu0 0
  %23 = vperm.xlu0 %22, %v15
  %v24 = vpop.permute.xlu0 %23
  %v27 = vlaneseq
  %v28 = vshrl.u32 %v27, 7
  %v29 = vsub.s32 0, %v28
  %v30 = vrot.slane %v11, %v29
  %v32 = vmul.f32 %v19, %v30
  %v33 = vmul.f32 %v24, %v30
  %vm34 = vcmask 57344
  %35 = vst.msk [vmem:[%s2] sm:$0x1] %vm34, %v11
  %v36 = vand.u32 2147483647, %v32
  %vm37 = vcmp.le.f32.partialorder %v36, 0.7853982
  %vm38 = vcmp.lt.s32.totalorder %v32, 0
  %v39 = vand.u32 %v32, 2139095040
  %v40 = vshrl.u32 %v39, 23
  %v41 = vsub.s32 %v40, 127
  %v42 = vand.u32 2147483647, %v32
  %v43 = vand.u32 %v42, 8388607
  %v44 = vor.u32 %v43, 8388608
  %v45 = vsub.s32 0, %v44
  %v46 = vadd.s32 %v41, 1
  %vm47 = vcmp.gt.s32.totalorder %v46, 0
  %v48 = vsel %vm47, %v46, 0
  %v49 = vshrl.u32 %v48, 5
  %v50 = vand.u32 %v48, 31
  %v51 = vsub.s32 32, %v50
  %v52 = vshrl.u32 683565275, %v51
  %v53 = vshll.u32 683565275, %v50
  %v54 = vshrl.u32 2475754826, %v51
  %v55 = vor.u32 %v53, %v54
  %v56 = vshll.u32 2475754826, %v50
  %v57 = vshrl.u32 2131351028, %v51
  %v58 = vor.u32 %v56, %v57
  %v59 = vshll.u32 2131351028, %v50
  %v60 = vshrl.u32 2102212464, %v51
  %v61 = vor.u32 %v59, %v60
  %v62 = vshll.u32 2102212464, %v50
  %v63 = vshrl.u32 920167782, %v51
  %v64 = vor.u32 %v62, %v63
  %v65 = vshll.u32 920167782, %v50
  %v66 = vshrl.u32 1326507024, %v51
  %v67 = vor.u32 %v65, %v66
  %vm68 = vcmp.lt.s32.totalorder %v49, 1
  %vm69 = vcmp.lt.s32.totalorder %v49, 2
  %vm70 = vcmp.lt.s32.totalorder %v49, 3
  %vm71 = vcmp.lt.s32.totalorder %v49, 4
  %v72 = vsel %vm68, %v52, %v55
  %v73 = vsel %vm71, %v61, 2102212464
  %v74 = vsel %vm70, %v58, %v73
  %v75 = vsel %vm69, %v72, %v74
  %v76 = vsel %vm68, %v55, %v58
  %v77 = vsel %vm71, %v64, 920167782
  %v78 = vsel %vm70, %v61, %v77
  %v79 = vsel %vm69, %v76, %v78
  %v80 = vsel %vm68, %v58, %v61
  %v81 = vsel %vm71, %v67, 1326507024
  %v82 = vsel %vm70, %v64, %v81
  %v83 = vsel %vm69, %v80, %v82
  %v84 = vshll.u32 %v44, 8
  %v85 = vmul.u32.u64.compose %v84, %v83
  %v86 = vextract.low.u32 %v85
  %v87 = vextract.high.u32 %v85
  %v88 = vmul.u32.u64.compose %v84, %v79
  %v89 = vextract.low.u32 %v88
  %v90 = vextract.high.u32 %v88
  %v91 = vmul.u32 %v84, %v75
  %v92 = vadd.s32 %v87, %v89
  %vm93 = vc.u32 %v87, %v89
  %v94 = vadd.s32 %v90, 1
  %v95 = vsel %vm93, %v94, %v90
  %v96 = vadd.s32 %v91, %v95
  %v97 = vadd.s32 %v96, 536870912
  %v98 = vshrl.u32 %v97, 30
  %v99 = vshll.u32 %v98, 30
  %v100 = vsub.s32 %v96, %v99
  %vm101 = vcmp.lt.s32.totalorder %v100, 0
  %v102 = vsub.s32 0, %v100
  %v103 = vsel %vm101, %v102, %v100
  %v104 = vclz %v103
  %v105 = vsub.s32 %v104, 2
  %vm106 = vcmp.gt.s32.totalorder 0, %v105
  %v107 = vsel %vm106, 0, %v105
  %v108 = vsub.s32 32, %v107
  %v109 = vshll.u32 %v100, %v107
  %v110 = vshrl.u32 %v92, %v108
  %v111 = vor.u32 %v109, %v110
  %v112 = vsub.s32 4294967266, %v107
  %v113 = vadd.s32 %v112, 127
  %v114 = vshll.u32 %v113, 23
  %v115 = vor.u32 4788187, %v114
  %v116 = vand.u32 2147483647, %v115
  %v118 = vcvt.s32.f32 %v111
  %v119 = vmul.f32 %v118, %v116
  %v120 = vxor.u32 %v119, 2147483648
  %v121 = vsel %vm38, %v120, %v119
  %v122 = vsub.s32 4, %v98
  %v123 = vsel %vm38, %v122, %v98
  %v124 = vsel %vm37, %v32, %v121
  %v125 = vsel %vm37, 0, %v123
  %v126 = vcosq.f32.pop %v124
  %v127 = vsinq.f32.pop %v124
  %vm128 = vweird.f32 %v32
  %v129 = vadd.s32 %v125, 3
  %v130 = vand.u32 %v129, 3
  %vm131 = vcmp.lt.s32.totalorder %v130, 2
  %vm132 = vcmp.eq.s32.totalorder %v130, 0
  %v133 = vxor.u32 %v127, 2147483648
  %v134 = vsel %vm132, %v126, %v133
  %vm135 = vcmp.eq.s32.totalorder %v130, 2
  %v136 = vxor.u32 %v126, 2147483648
  %v137 = vsel %vm135, %v136, %v127
  %v138 = vsel %vm131, %v134, %v137
  %v139 = vsel %vm128, nan, %v138
  %v140 = vand.u32 2147483647, %v33
  %vm141 = vcmp.le.f32.partialorder %v140, 0.7853982
  %vm142 = vcmp.lt.s32.totalorder %v33, 0
  %v143 = vand.u32 %v33, 2139095040
  %v144 = vshrl.u32 %v143, 23
  %v145 = vsub.s32 %v144, 127
  %v146 = vand.u32 2147483647, %v33
  %v147 = vand.u32 %v146, 8388607
  %v148 = vor.u32 %v147, 8388608
  %v149 = vsub.s32 0, %v148
  %v150 = vadd.s32 %v145, 1
  %vm151 = vcmp.gt.s32.totalorder %v150, 0
  %v152 = vsel %vm151, %v150, 0
  %v153 = vshrl.u32 %v152, 5
  %v154 = vand.u32 %v152, 31
  %v155 = vsub.s32 32, %v154
  %v156 = vshrl.u32 683565275, %v155
  %v157 = vshll.u32 683565275, %v154
  %v158 = vshrl.u32 2475754826, %v155
  %v159 = vor.u32 %v157, %v158
  %v160 = vshll.u32 2475754826, %v154
  %v161 = vshrl.u32 2131351028, %v155
  %v162 = vor.u32 %v160, %v161
  %v163 = vshll.u32 2131351028, %v154
  %v164 = vshrl.u32 2102212464, %v155
  %v165 = vor.u32 %v163, %v164
  %v166 = vshll.u32 2102212464, %v154
  %v167 = vshrl.u32 920167782, %v155
  %v168 = vor.u32 %v166, %v167
  %v169 = vshll.u32 920167782, %v154
  %v170 = vshrl.u32 1326507024, %v155
  %v171 = vor.u32 %v169, %v170
  %vm172 = vcmp.lt.s32.totalorder %v153, 1
  %vm173 = vcmp.lt.s32.totalorder %v153, 2
  %vm174 = vcmp.lt.s32.totalorder %v153, 3
  %vm175 = vcmp.lt.s32.totalorder %v153, 4
  %v176 = vsel %vm172, %v156, %v159
  %v177 = vsel %vm175, %v165, 2102212464
  %v178 = vsel %vm174, %v162, %v177
  %v179 = vsel %vm173, %v176, %v178
  %v180 = vsel %vm172, %v159, %v162
  %v181 = vsel %vm175, %v168, 920167782
  %v182 = vsel %vm174, %v165, %v181
  %v183 = vsel %vm173, %v180, %v182
  %v184 = vsel %vm172, %v162, %v165
  %v185 = vsel %vm175, %v171, 1326507024
  %v186 = vsel %vm174, %v168, %v185
  %v187 = vsel %vm173, %v184, %v186
  %v188 = vshll.u32 %v148, 8
  %v189 = vmul.u32.u64.compose %v188, %v187
  %v190 = vextract.low.u32 %v189
  %v191 = vextract.high.u32 %v189
  %v192 = vmul.u32.u64.compose %v188, %v183
  %v193 = vextract.low.u32 %v192
  %v194 = vextract.high.u32 %v192
  %v195 = vmul.u32 %v188, %v179
  %v196 = vadd.s32 %v191, %v193
  %vm197 = vc.u32 %v191, %v193
  %v198 = vadd.s32 %v194, 1
  %v199 = vsel %vm197, %v198, %v194
  %v200 = vadd.s32 %v195, %v199
  %v201 = vadd.s32 %v200, 536870912
  %v202 = vshrl.u32 %v201, 30
  %v203 = vshll.u32 %v202, 30
  %v204 = vsub.s32 %v200, %v203
  %vm205 = vcmp.lt.s32.totalorder %v204, 0
  %v206 = vsub.s32 0, %v204
  %v207 = vsel %vm205, %v206, %v204
  %v208 = vclz %v207
  %v209 = vsub.s32 %v208, 2
  %vm210 = vcmp.gt.s32.totalorder 0, %v209
  %v211 = vsel %vm210, 0, %v209
  %v212 = vsub.s32 32, %v211
  %v213 = vshll.u32 %v204, %v211
  %v214 = vshrl.u32 %v196, %v212
  %v215 = vor.u32 %v213, %v214
  %v216 = vsub.s32 4294967266, %v211
  %v217 = vadd.s32 %v216, 127
  %v218 = vshll.u32 %v217, 23
  %v219 = vor.u32 4788187, %v218
  %v220 = vand.u32 2147483647, %v219
  %v222 = vcvt.s32.f32 %v215
  %v223 = vmul.f32 %v222, %v220
  %v224 = vxor.u32 %v223, 2147483648
  %v225 = vsel %vm142, %v224, %v223
  %v226 = vsub.s32 4, %v202
  %v227 = vsel %vm142, %v226, %v202
  %v228 = vsel %vm141, %v33, %v225
  %v229 = vsel %vm141, 0, %v227
  %v230 = vcosq.f32.pop %v228
  %v231 = vsinq.f32.pop %v228
  %vm232 = vweird.f32 %v33
  %v233 = vadd.s32 %v229, 3
  %v234 = vand.u32 %v233, 3
  %vm235 = vcmp.lt.s32.totalorder %v234, 2
  %vm236 = vcmp.eq.s32.totalorder %v234, 0
  %v237 = vxor.u32 %v231, 2147483648
  %v238 = vsel %vm236, %v230, %v237
  %vm239 = vcmp.eq.s32.totalorder %v234, 2
  %v240 = vxor.u32 %v230, 2147483648
  %v241 = vsel %vm239, %v240, %v231
  %v242 = vsel %vm235, %v238, %v241
  %v243 = vsel %vm232, nan, %v242
  %vm244 = vcmask 64512
  %245 = vst.msk [vmem:[%s2 + $0x1] sm:$0xff] %vm244, %v139
  %246 = vst.msk [vmem:[%s2 + $0x9] sm:$0xff] %vm244, %v243
  %v247 = vand.u32 2147483647, %v32
  %vm248 = vcmp.le.f32.partialorder %v247, 0.7853982
  %vm249 = vcmp.lt.s32.totalorder %v32, 0
  %v250 = vand.u32 %v32, 2139095040
  %v251 = vshrl.u32 %v250, 23
  %v252 = vsub.s32 %v251, 127
  %v253 = vand.u32 2147483647, %v32
  %v254 = vand.u32 %v253, 8388607
  %v255 = vor.u32 %v254, 8388608
  %v256 = vsub.s32 0, %v255
  %v257 = vadd.s32 %v252, 1
  %vm258 = vcmp.gt.s32.totalorder %v257, 0
  %v259 = vsel %vm258, %v257, 0
  %v260 = vshrl.u32 %v259, 5
  %v261 = vand.u32 %v259, 31
  %v262 = vsub.s32 32, %v261
  %v263 = vshrl.u32 683565275, %v262
  %v264 = vshll.u32 683565275, %v261
  %v265 = vshrl.u32 2475754826, %v262
  %v266 = vor.u32 %v264, %v265
  %v267 = vshll.u32 2475754826, %v261
  %v268 = vshrl.u32 2131351028, %v262
  %v269 = vor.u32 %v267, %v268
  %v270 = vshll.u32 2131351028, %v261
  %v271 = vshrl.u32 2102212464, %v262
  %v272 = vor.u32 %v270, %v271
  %v273 = vshll.u32 2102212464, %v261
  %v274 = vshrl.u32 920167782, %v262
  %v275 = vor.u32 %v273, %v274
  %v276 = vshll.u32 920167782, %v261
  %v277 = vshrl.u32 1326507024, %v262
  %v278 = vor.u32 %v276, %v277
  %vm279 = vcmp.lt.s32.totalorder %v260, 1
  %vm280 = vcmp.lt.s32.totalorder %v260, 2
  %vm281 = vcmp.lt.s32.totalorder %v260, 3
  %vm282 = vcmp.lt.s32.totalorder %v260, 4
  %v283 = vsel %vm279, %v263, %v266
  %v284 = vsel %vm282, %v272, 2102212464
  %v285 = vsel %vm281, %v269, %v284
  %v286 = vsel %vm280, %v283, %v285
  %v287 = vsel %vm279, %v266, %v269
  %v288 = vsel %vm282, %v275, 920167782
  %v289 = vsel %vm281, %v272, %v288
  %v290 = vsel %vm280, %v287, %v289
  %v291 = vsel %vm279, %v269, %v272
  %v292 = vsel %vm282, %v278, 1326507024
  %v293 = vsel %vm281, %v275, %v292
  %v294 = vsel %vm280, %v291, %v293
  %v295 = vshll.u32 %v255, 8
  %v296 = vmul.u32.u64.compose %v295, %v294
  %v297 = vextract.low.u32 %v296
  %v298 = vextract.high.u32 %v296
  %v299 = vmul.u32.u64.compose %v295, %v290
  %v300 = vextract.low.u32 %v299
  %v301 = vextract.high.u32 %v299
  %v302 = vmul.u32 %v295, %v286
  %v303 = vadd.s32 %v298, %v300
  %vm304 = vc.u32 %v298, %v300
  %v305 = vadd.s32 %v301, 1
  %v306 = vsel %vm304, %v305, %v301
  %v307 = vadd.s32 %v302, %v306
  %v308 = vadd.s32 %v307, 536870912
  %v309 = vshrl.u32 %v308, 30
  %v310 = vshll.u32 %v309, 30
  %v311 = vsub.s32 %v307, %v310
  %vm312 = vcmp.lt.s32.totalorder %v311, 0
  %v313 = vsub.s32 0, %v311
  %v314 = vsel %vm312, %v313, %v311
  %v315 = vclz %v314
  %v316 = vsub.s32 %v315, 2
  %vm317 = vcmp.gt.s32.totalorder 0, %v316
  %v318 = vsel %vm317, 0, %v316
  %v319 = vsub.s32 32, %v318
  %v320 = vshll.u32 %v311, %v318
  %v321 = vshrl.u32 %v303, %v319
  %v322 = vor.u32 %v320, %v321
  %v323 = vsub.s32 4294967266, %v318
  %v324 = vadd.s32 %v323, 127
  %v325 = vshll.u32 %v324, 23
  %v326 = vor.u32 4788187, %v325
  %v327 = vand.u32 2147483647, %v326
  %v329 = vcvt.s32.f32 %v322
  %v330 = vmul.f32 %v329, %v327
  %v331 = vxor.u32 %v330, 2147483648
  %v332 = vsel %vm249, %v331, %v330
  %v333 = vsub.s32 4, %v309
  %v334 = vsel %vm249, %v333, %v309
  %v335 = vsel %vm248, %v32, %v332
  %v336 = vsel %vm248, 0, %v334
  %v337 = vcosq.f32.pop %v335
  %v338 = vsinq.f32.pop %v335
  %vm339 = vweird.f32 %v32
  %v340 = vand.u32 %v336, 3
  %vm341 = vcmp.lt.s32.totalorder %v340, 2
  %vm342 = vcmp.eq.s32.totalorder %v340, 0
  %v343 = vxor.u32 %v338, 2147483648
  %v344 = vsel %vm342, %v337, %v343
  %vm345 = vcmp.eq.s32.totalorder %v340, 2
  %v346 = vxor.u32 %v337, 2147483648
  %v347 = vsel %vm345, %v346, %v338
  %v348 = vsel %vm341, %v344, %v347
  %v349 = vsel %vm339, nan, %v348
  %v350 = vand.u32 2147483647, %v33
  %vm351 = vcmp.le.f32.partialorder %v350, 0.7853982
  %vm352 = vcmp.lt.s32.totalorder %v33, 0
  %v353 = vand.u32 %v33, 2139095040
  %v354 = vshrl.u32 %v353, 23
  %v355 = vsub.s32 %v354, 127
  %v356 = vand.u32 2147483647, %v33
  %v357 = vand.u32 %v356, 8388607
  %v358 = vor.u32 %v357, 8388608
  %v359 = vsub.s32 0, %v358
  %v360 = vadd.s32 %v355, 1
  %vm361 = vcmp.gt.s32.totalorder %v360, 0
  %v362 = vsel %vm361, %v360, 0
  %v363 = vshrl.u32 %v362, 5
  %v364 = vand.u32 %v362, 31
  %v365 = vsub.s32 32, %v364
  %v366 = vshrl.u32 683565275, %v365
  %v367 = vshll.u32 683565275, %v364
  %v368 = vshrl.u32 2475754826, %v365
  %v369 = vor.u32 %v367, %v368
  %v370 = vshll.u32 2475754826, %v364
  %v371 = vshrl.u32 2131351028, %v365
  %v372 = vor.u32 %v370, %v371
  %v373 = vshll.u32 2131351028, %v364
  %v374 = vshrl.u32 2102212464, %v365
  %v375 = vor.u32 %v373, %v374
  %v376 = vshll.u32 2102212464, %v364
  %v377 = vshrl.u32 920167782, %v365
  %v378 = vor.u32 %v376, %v377
  %v379 = vshll.u32 920167782, %v364
  %v380 = vshrl.u32 1326507024, %v365
  %v381 = vor.u32 %v379, %v380
  %vm382 = vcmp.lt.s32.totalorder %v363, 1
  %vm383 = vcmp.lt.s32.totalorder %v363, 2
  %vm384 = vcmp.lt.s32.totalorder %v363, 3
  %vm385 = vcmp.lt.s32.totalorder %v363, 4
  %v386 = vsel %vm382, %v366, %v369
  %v387 = vsel %vm385, %v375, 2102212464
  %v388 = vsel %vm384, %v372, %v387
  %v389 = vsel %vm383, %v386, %v388
  %v390 = vsel %vm382, %v369, %v372
  %v391 = vsel %vm385, %v378, 920167782
  %v392 = vsel %vm384, %v375, %v391
  %v393 = vsel %vm383, %v390, %v392
  %v394 = vsel %vm382, %v372, %v375
  %v395 = vsel %vm385, %v381, 1326507024
  %v396 = vsel %vm384, %v378, %v395
  %v397 = vsel %vm383, %v394, %v396
  %v398 = vshll.u32 %v358, 8
  %v399 = vmul.u32.u64.compose %v398, %v397
  %v400 = vextract.low.u32 %v399
  %v401 = vextract.high.u32 %v399
  %v402 = vmul.u32.u64.compose %v398, %v393
  %v403 = vextract.low.u32 %v402
  %v404 = vextract.high.u32 %v402
  %v405 = vmul.u32 %v398, %v389
  %v406 = vadd.s32 %v401, %v403
  %vm407 = vc.u32 %v401, %v403
  %v408 = vadd.s32 %v404, 1
  %v409 = vsel %vm407, %v408, %v404
  %v410 = vadd.s32 %v405, %v409
  %v411 = vadd.s32 %v410, 536870912
  %v412 = vshrl.u32 %v411, 30
  %v413 = vshll.u32 %v412, 30
  %v414 = vsub.s32 %v410, %v413
  %vm415 = vcmp.lt.s32.totalorder %v414, 0
  %v416 = vsub.s32 0, %v414
  %v417 = vsel %vm415, %v416, %v414
  %v418 = vclz %v417
  %v419 = vsub.s32 %v418, 2
  %vm420 = vcmp.gt.s32.totalorder 0, %v419
  %v421 = vsel %vm420, 0, %v419
  %v422 = vsub.s32 32, %v421
  %v423 = vshll.u32 %v414, %v421
  %v424 = vshrl.u32 %v406, %v422
  %v425 = vor.u32 %v423, %v424
  %v426 = vsub.s32 4294967266, %v421
  %v427 = vadd.s32 %v426, 127
  %v428 = vshll.u32 %v427, 23
  %v429 = vor.u32 4788187, %v428
  %v430 = vand.u32 2147483647, %v429
  %v432 = vcvt.s32.f32 %v425
  %v433 = vmul.f32 %v432, %v430
  %v434 = vxor.u32 %v433, 2147483648
  %v435 = vsel %vm352, %v434, %v433
  %v436 = vsub.s32 4, %v412
  %v437 = vsel %vm352, %v436, %v412
  %v438 = vsel %vm351, %v33, %v435
  %v439 = vsel %vm351, 0, %v437
  %v440 = vcosq.f32.pop %v438
  %v441 = vsinq.f32.pop %v438
  %vm442 = vweird.f32 %v33
  %v443 = vand.u32 %v439, 3
  %vm444 = vcmp.lt.s32.totalorder %v443, 2
  %vm445 = vcmp.eq.s32.totalorder %v443, 0
  %v446 = vxor.u32 %v441, 2147483648
  %v447 = vsel %vm445, %v440, %v446
  %vm448 = vcmp.eq.s32.totalorder %v443, 2
  %v449 = vxor.u32 %v440, 2147483648
  %v450 = vsel %vm448, %v449, %v441
  %v451 = vsel %vm444, %v447, %v450
  %v452 = vsel %vm442, nan, %v451
  %453 = vst.msk [vmem:[%s2 + $0x11] sm:$0xff] %vm244, %v349
  %454 = vst.msk [vmem:[%s2 + $0x19] sm:$0xff] %vm244, %v452
  // Predicated region
  $region10: #{tpu_custom_call.1} parent=0 // pred_check
    _
  $region11: #{tpu_custom_call.1} parent=0 // pred_check_branch
    %456 = sbr.rel (0) target = $region13
  $region12: #{tpu_custom_call.1} parent=0 // pred_region
    _
  $region13: #{tpu_custom_call.1} parent=0 // pred_fallthru
    _
  // Predicated region
  $region14: #{tpu_custom_call.1} parent=0 // pred_check
    _
  $region15: #{tpu_custom_call.1} parent=0 // pred_check_branch
    %458 = sbr.rel (0) target = $region17
  $region16: #{tpu_custom_call.1} parent=0 // pred_region
    _
  $region17: #{tpu_custom_call.1} parent=0 // pred_fallthru
    _

</llo_original>
